<compile_context>
chip_gen: v7x
topology: tpu7x:2x2x1
jax: 0.10.0
libtpu: 0.0.40
codegen_flags: <defaults>
</compile_context>

<pallas_src>
import functools

import jax
import jax.numpy as jnp
from jax import lax
from jax.experimental import pallas as pl
from jax.experimental.pallas import tpu as pltpu


# ----------------- pltpu.roll rotation-direction probe (one time) ------------


def _probe_roll_kernel(x_ref, o_ref):
    o_ref[...] = pltpu.roll(x_ref[...], 1, axis=1)


@functools.lru_cache(maxsize=None)
def _roll_matches_numpy():
    """True iff pltpu.roll(x, s, axis) == jnp.roll(x, s, axis) on this backend.

    The C2f kernel expresses the 3x3 conv taps as lane rotations of the flat
    (C, H*W) activation; probing the rotation direction once keeps the tap
    shift sign provably correct.
    """
    x = jnp.broadcast_to(jnp.arange(128, dtype=jnp.float32), (8, 128))
    y = pl.pallas_call(
        _probe_roll_kernel,
        out_shape=jax.ShapeDtypeStruct((8, 128), jnp.float32),
    )(x)
    return bool(jax.device_get(y)[0, 0] == 127.0)


# ----------------------------------- kernel ----------------------------------


def make_c2f_kernel(n, H, W, c1, c, c2, shortcut, roll_like_np):
    """Builds the C2f kernel for a fixed number of bottlenecks `n`."""
    HW = H * W
    P = 4 + 4 * n  # number of parameter refs

    def kernel(x_ref, *refs):
        param_refs = refs[:P]
        out_ref = refs[P]

        # Static border masks for the 9 taps of a "same"-padded 3x3 conv,
        # built once per kernel invocation and reused by every bottleneck.
        pos = lax.broadcasted_iota(jnp.int32, (1, HW), 1)
        hh = pos // W
        ww = pos % W
        masks = {}
        for ky in range(3):
            for kx in range(3):
                dy, dx = ky - 1, kx - 1
                conds = []
                if dy == -1:
                    conds.append(hh >= 1)
                elif dy == 1:
                    conds.append(hh <= H - 2)
                if dx == -1:
                    conds.append(ww >= 1)
                elif dx == 1:
                    conds.append(ww <= W - 2)
                m = None
                for cnd in conds:
                    m = cnd if m is None else jnp.logical_and(m, cnd)
                masks[(ky, kx)] = m

        def tap(xf, ky, kx):
            # xf: (cin, HW) f32, HW flattened row-major over (H, W).  Returns
            # the activation shifted so column p = h*W + w holds input pixel
            # (h + ky - 1, w + kx - 1), zero outside the image.
            s = (ky - 1) * W + (kx - 1)
            if s == 0:
                shifted = xf
            else:
                amt = (-s) % HW if roll_like_np else s % HW
                shifted = pltpu.roll(xf, amt, axis=1)  # lane rotation (XLU)
            m = masks[(ky, kx)]
            return shifted if m is None else jnp.where(m, shifted, 0.0)

        def conv3x3_silu(xf, w_ref, b_ref):
            # xf: (cin, HW) f32; w_ref: (cout, 9*cin) bf16; b_ref: (cout,1) f32.
            # im2col along the contraction axis: ONE MXU matmul with K = 9*cin
            # instead of 9 matmuls with K = cin.  No padded scratch, no
            # zero-fills, no sublane-unaligned slices.
            cols = jnp.concatenate(
                [tap(xf, ky, kx) for ky in range(3) for kx in range(3)], axis=0
            ).astype(jnp.bfloat16)
            acc = jnp.dot(w_ref[...], cols, preferred_element_type=jnp.float32)
            acc = acc + b_ref[...]
            return acc * jax.nn.sigmoid(acc)  # SiLU (f32)

        w1_ref, b1_ref = param_refs[0], param_refs[1]
        w2_ref, b2_ref = param_refs[2 + 4 * n], param_refs[3 + 4 * n]

        x_bf = x_ref[0]  # (c1, HW) bf16, lane-dense

        # cv1 (1x1 conv + BN + SiLU), produced directly as its two chunks so
        # chunk(2) never slices the channel (sublane) axis.
        def cv1_chunk(j):
            a = jnp.dot(w1_ref[j], x_bf, preferred_element_type=jnp.float32)
            a = a + b1_ref[j]
            return a * jax.nn.sigmoid(a)  # (c, HW) f32

        y_a = cv1_chunk(0)
        y_b = cv1_chunk(1)

        # cv2 without a materialized concat:
        #   cat([y_a, y_b, z_1..z_n]) @ W2 == sum_i branch_i @ W2_chunk_i,
        # so each branch is folded into one (c2, HW) f32 accumulator as soon as
        # it is produced (minimal live activations / vreg pressure).
        acc = jnp.dot(w2_ref[0], y_a.astype(jnp.bfloat16),
                      preferred_element_type=jnp.float32)
        acc = acc + jnp.dot(w2_ref[1], y_b.astype(jnp.bfloat16),
                            preferred_element_type=jnp.float32)
        acc = acc + b2_ref[...]

        cur = y_b
        for i in range(n):
            wk1, bk1 = param_refs[2 + 4 * i], param_refs[3 + 4 * i]
            wk2, bk2 = param_refs[4 + 4 * i], param_refs[5 + 4 * i]
            z = conv3x3_silu(cur, wk1, bk1)
            z = conv3x3_silu(z, wk2, bk2)
            if shortcut:
                z = cur + z
            acc = acc + jnp.dot(w2_ref[2 + i], z.astype(jnp.bfloat16),
                                preferred_element_type=jnp.float32)
            cur = z

        o = acc * jax.nn.sigmoid(acc)  # cv2 SiLU
        out_ref[0] = o.astype(out_ref.dtype)

    return kernel


def _zero_map(nd):
    return lambda b: (0,) * nd


def c2f_pallas(x_nchw, params, n, shortcut, c, c2):
    N, c1, H, W = x_nchw.shape
    HW = H * W
    # NCHW -> (N, C, H*W): channels on sublanes, H*W (multiple of 128) on lanes.
    x = x_nchw.reshape(N, c1, HW).astype(jnp.bfloat16)

    w1, b1 = params["cv1"]  # (c1, 2c), (2c,)
    w2, b2 = params["cv2"]  # ((2+n)c, c2), (c2,)

    # Channels-first weights: out = W @ x with x laid out (Cin, H*W).
    w1s = jnp.transpose(w1).reshape(2, c, c1).astype(jnp.bfloat16)   # cv1, pre-chunked
    b1s = b1.reshape(2, c, 1).astype(jnp.float32)
    w2s = (jnp.transpose(w2).reshape(c2, 2 + n, c)
           .transpose(1, 0, 2).astype(jnp.bfloat16))                 # cv2, per-branch chunks
    b2v = b2.reshape(c2, 1).astype(jnp.float32)

    flat = [w1s, b1s]
    for (wa, ba, wb, bb) in params["m"]:
        # HWIO (3,3,cin,cout) -> (cout, 9*cin), matching the in-kernel im2col order.
        flat += [
            jnp.transpose(wa, (3, 0, 1, 2)).reshape(c, 9 * c).astype(jnp.bfloat16),
            ba.reshape(c, 1).astype(jnp.float32),
            jnp.transpose(wb, (3, 0, 1, 2)).reshape(c, 9 * c).astype(jnp.bfloat16),
            bb.reshape(c, 1).astype(jnp.float32),
        ]
    flat += [w2s, b2v]

    kernel = make_c2f_kernel(n, H, W, c1, c, c2, shortcut, _roll_matches_numpy())

    in_specs = [pl.BlockSpec((1, c1, HW), lambda b: (b, 0, 0))]
    # Weight/bias blocks: full arrays with constant index maps.
    in_specs += [pl.BlockSpec(p.shape, _zero_map(p.ndim)) for p in flat]

    out = pl.pallas_call(
        kernel,
        out_shape=jax.ShapeDtypeStruct((N, c2, HW), jnp.float32),
        grid_spec=pltpu.PrefetchScalarGridSpec(
            num_scalar_prefetch=0,
            grid=(N,),
            in_specs=in_specs,
            out_specs=pl.BlockSpec((1, c2, HW), lambda b: (b, 0, 0)),
        ),
        compiler_params=pltpu.CompilerParams(dimension_semantics=("parallel",)),
    )(x, *flat)

    return out.reshape(N, c2, H, W)  # already NCHW — no transpose needed


# ------------------------ params (deterministic) -----------------------------


def make_conv_params(key, cin, cout, k):
    """Conv2d(bias=False) + BatchNorm2d folded into (HWIO weight, bias)."""
    kw, kg, kb, km, kv = jax.random.split(key, 5)
    w = jax.random.normal(kw, (k, k, cin, cout), jnp.float32) * 0.1  # HWIO
    gamma = jax.random.uniform(kg, (cout,), minval=0.5, maxval=1.5)
    beta = jax.random.normal(kb, (cout,), jnp.float32) * 0.1
    mean = jax.random.normal(km, (cout,), jnp.float32) * 0.1
    var = jax.random.uniform(kv, (cout,), minval=0.5, maxval=1.5)
    scale = gamma / jnp.sqrt(var + 1e-5)  # BN eval-mode fold
    return w * scale, beta - mean * scale


def init_params(key, c1, c2, n, e=0.5):
    c = int(c2 * e)
    keys = jax.random.split(key, 2 + 2 * n)
    w1, b1 = make_conv_params(keys[0], c1, 2 * c, 1)
    m = []
    for i in range(n):
        wa, ba = make_conv_params(keys[2 + 2 * i], c, c, 3)
        wb, bb = make_conv_params(keys[3 + 2 * i], c, c, 3)
        m.append((wa, ba, wb, bb))
    w2, b2 = make_conv_params(keys[1], (2 + n) * c, c2, 1)
    return {"cv1": (w1[0, 0], b1), "m": m, "cv2": (w2[0, 0], b2)}, c


# --------------------------- pure-JAX reference ------------------------------


def c2f_reference(x_nchw, params, n, shortcut, c, c2):
    x = jnp.transpose(x_nchw, (0, 2, 3, 1)).astype(jnp.float32)
    w1, b1 = params["cv1"]
    y = jax.nn.silu(jnp.einsum("nhwc,cd->nhwd", x, w1) + b1)
    ys = [y[..., :c], y[..., c:2 * c]]
    cur = ys[-1]
    dn = ("NHWC", "HWIO", "NHWC")
    for (wa, ba, wb, bb) in params["m"]:
        z = jax.nn.silu(
            lax.conv_general_dilated(cur, wa, (1, 1), "SAME", dimension_numbers=dn) + ba
        )
        z = jax.nn.silu(
            lax.conv_general_dilated(z, wb, (1, 1), "SAME", dimension_numbers=dn) + bb
        )
        if shortcut:
            z = cur + z
        ys.append(z)
        cur = z
    cat = jnp.concatenate(ys, axis=-1)
    w2, b2 = params["cv2"]
    out = jax.nn.silu(jnp.einsum("nhwc,cd->nhwd", cat, w2) + b2)
    return jnp.transpose(out, (0, 3, 1, 2))


# --------------------------------- main --------------------------------------

if __name__ == "__main__":
    N, c1, H, W = 2, 4, 16, 16
    c2, n, shortcut = 8, 1, False  # C2f defaults: shortcut=False, e=0.5

    key = jax.random.PRNGKey(0)
    kx, kp = jax.random.split(key)
    x = jax.random.normal(kx, (N, c1, H, W), jnp.float32)  # NCHW, as PyTorch

    params, c = init_params(kp, c1, c2, n)

    out = jax.block_until_ready(c2f_pallas(x, params, n, shortcut, c, c2))
    ref = jax.block_until_ready(c2f_reference(x, params, n, shortcut, c, c2))

    assert out.shape == (N, c2, H, W)
    # bf16 MXU inputs with f32 accumulation -> compare with a modest tolerance.
    max_err = float(jnp.max(jnp.abs(out - ref)))
    assert jnp.allclose(out, ref, rtol=3e-2, atol=3e-2), max_err

    print("KERNEL_OK")
</pallas_src>

<mosaic_0001>
module attributes {stable_mosaic.version = 11 : i64} {
  func.func @_probe_roll_kernel(%arg0: memref<8x128xf32, #tpu.memory_space<vmem>>, %arg1: memref<8x128xf32, #tpu.memory_space<vmem>>) attributes {dimension_semantics = [], scalar_prefetch = 0 : i64, scratch_operands = 0 : i64, tpu.core_type = #tpu.core_type<tc>} {
    %c0 = arith.constant 0 : index
    %c0_0 = arith.constant 0 : index
    %0 = vector.load %arg0[%c0, %c0_0] : memref<8x128xf32, #tpu.memory_space<vmem>>, vector<8x128xf32>
    %c1_i32 = arith.constant 1 : i32
    %1 = tpu.dynamic_rotate %0 by %c1_i32 dim 1 : vector<8x128xf32>, i32 -> vector<8x128xf32>
    %c0_1 = arith.constant 0 : index
    %c0_2 = arith.constant 0 : index
    %2 = vector.load %arg1[%c0_1, %c0_2] : memref<8x128xf32, #tpu.memory_space<vmem>>, vector<8x128xf32>
    tpu.vector_store %arg1[%c0_1, %c0_2], %1 {strides = array<i32>} : memref<8x128xf32, #tpu.memory_space<vmem>>, vector<8x128xf32>,
    return
  }
}

</mosaic_0001>

<llo_original>
// kernel: tpu_custom_call.1
$region0: #{tpu_custom_call.1}
  #allocation0 [shape = 'u32[]', space=smem, size = 0x4, offset = 0x4, fixed_abs, tag = 'smem constant byte address 0x4 - core index']
  #allocation1 [shape = 'u32[144,128]{1,0:T(1,128)}', space=vmem, size = 0x12000, scoped, tag = 'internal scratch']
  %s0 = inlined_call_operand.hbm [shape: f32[8,128], index: 0, kind: input, shape index: {}]
  %s1 = inlined_call_operand.hbm [shape: f32[8,128], index: 1, kind: output, shape index: {}]
  %s2 = sld [smem:[#allocation0]]
  $region18: #{tpu_custom_call.1} parent=0
    _
  %s4 = ssub.s32 1, %s2
  %s5 = scalar_select 0, %s4, %s2
  $region1: #{tpu_custom_call.1} parent=0
    #allocation2 [shape = 'u8[4096]{0}', space=vmem, size = 0x1000, scoped, tag = 'input window, operand 0, single buffered']
    #allocation3 [shape = 's32[1]{0}', space=sflag, size = 0x4, scoped, tag = 'scoped memory for tpu_custom_call.1']
    #allocation4 [shape = 's32[1]{0}', space=sflag, size = 0x4, scoped, tag = 'scoped memory for tpu_custom_call.1']
    #allocation5 [shape = 'u8[4096]{0}', space=vmem, size = 0x1000, scoped, tag = 'output window, operand 0, single buffered']
    %6 = vsyncpa [#allocation3], 0
    %7 = vsyncpa [#allocation4], 0
    // Predicated region
    $region2: #{tpu_custom_call.1} parent=1 // pred_check
      _
    $region3: #{tpu_custom_call.1} parent=1 // pred_check_branch
      %9 = sbr.rel (0) target = $region5
    $region4: #{tpu_custom_call.1} parent=1 // pred_region
      %s11 = ssub.s32 128, 128
      %12 = vsyncadd [#allocation3], %s11
      %s14 = sshll.u32 [#allocation2], 4
      %s15 = int_to_ptr.vmem [resolvable:$true] %s14
      %17 = dma.hbm_to_vmem [thread:$0]  %s0, 128, %s15, [#allocation3]
    $region5: #{tpu_custom_call.1} parent=1 // pred_fallthru
      _
    // Predicated region
    $region6: #{tpu_custom_call.1} parent=1 // pred_check
      _
    $region7: #{tpu_custom_call.1} parent=1 // pred_check_branch
      %19 = sbr.rel (0) target = $region9
    $region8: #{tpu_custom_call.1} parent=1 // pred_region
      %20 = dma.done [#allocation3], 128
    $region9: #{tpu_custom_call.1} parent=1 // pred_fallthru
      _
    %v21 = vld [vmem:[#allocation2] sm:$0xff]
    %22 = vrot.lane.b32.xlu0 %v21, 1
    %v23 = vpop.permute.xlu0 %22
    %24 = vst [vmem:[#allocation5] sm:$0xff] %v23
    // Predicated region
    $region10: #{tpu_custom_call.1} parent=1 // pred_check
      _
    $region11: #{tpu_custom_call.1} parent=1 // pred_check_branch
      %26 = sbr.rel (0) target = $region13
    $region12: #{tpu_custom_call.1} parent=1 // pred_region
      %s28 = ssub.s32 128, 128
      %29 = vsyncadd [#allocation4], %s28
      %s31 = sshll.u32 [#allocation5], 4
      %s32 = int_to_ptr.vmem [resolvable:$true] %s31
      %34 = dma.vmem_to_hbm [thread:$0]  %s32, 128, %s1, [#allocation4]
    $region13: #{tpu_custom_call.1} parent=1 // pred_fallthru
      _
    // Predicated region
    $region14: #{tpu_custom_call.1} parent=1 // pred_check
      _
    $region15: #{tpu_custom_call.1} parent=1 // pred_check_branch
      %36 = sbr.rel (0) target = $region17
    $region16: #{tpu_custom_call.1} parent=1 // pred_region
      %37 = dma.done [#allocation4], 128
    $region17: #{tpu_custom_call.1} parent=1 // pred_fallthru
      _
    %38 = vsyncpa [#allocation3], 1
    %39 = vsyncpa [#allocation4], 1

</llo_original>
